<compile_context>
chip_gen: v6e
topology: v6e:2x2x1
jax: 0.10.0
libtpu: 0.0.40
codegen_flags: <defaults>
</compile_context>

<pallas_src>
import functools

import jax
import jax.numpy as jnp
from jax.experimental import pallas as pl
from jax.experimental.pallas import tpu as pltpu


def _round_up(x, m):
    return ((x + m - 1) // m) * m


def _largest_aligned_divisor(total, cap):
    """Largest multiple of 128 that divides `total` (itself a multiple of 128)
    and is <= cap.  Guarantees zero tile-driven over-padding."""
    t = (min(cap, total) // 128) * 128
    while t > 128 and total % t != 0:
        t -= 128
    return max(t, 128)


def _tile_budget(weight_dtype):
    """Per-generation weight-tile byte budget + VMEM limit.

    v7x: 3.2 TB/s HBM makes the ~0.35 us per-grid-step overhead dominant, and
    it has 64 MiB VMEM -> biggest tiles.  v5e: only 16 MiB default scoped VMEM
    -> smallest.  Unknown devices fall back to the conservative setting.
    """
    kind = ""
    try:
        kind = jax.devices()[0].device_kind.lower()
    except Exception:
        pass
    if "v5" in kind:
        tile_bytes, vmem_limit = 2 * 1024 * 1024, None
    elif "v6" in kind:
        tile_bytes, vmem_limit = 4 * 1024 * 1024, 64 * 1024 * 1024
    elif "7" in kind:
        tile_bytes, vmem_limit = 8 * 1024 * 1024, 48 * 1024 * 1024
    else:
        tile_bytes, vmem_limit = 2 * 1024 * 1024, None
    tn_max = 512  # keeps >=2 output blocks (v7x megacore split) at realistic N
    itemsize = jnp.dtype(weight_dtype).itemsize
    tk_max = max(128, (tile_bytes // (tn_max * itemsize) // 128) * 128)
    return tk_max, tn_max, vmem_limit


def _linear_kernel(x_ref, w_ref, b_ref, o_ref, acc_ref, *, tk, nk):
    # x_ref:   (1, K_pad)  VMEM  full input, resident across all grid steps
    # w_ref:   (tk, tn)    VMEM  weight tile (W^T layout: (in, out))
    # b_ref:   (1, tn)     VMEM  bias tile (f32)
    # o_ref:   (1, tn)     VMEM  output tile (resident across the K axis)
    # acc_ref: (1, tn)     VMEM  f32 accumulator scratch
    k = pl.program_id(1)

    @pl.when(k == 0)
    def _():
        acc_ref[...] = jnp.zeros_like(acc_ref)

    if nk == 1:
        x_blk = x_ref[...]
    else:
        # tk is a multiple of 128 whenever nk > 1, so this is an aligned slice.
        start = pl.multiple_of(k * tk, tk)
        x_blk = x_ref[:, pl.ds(start, tk)]

    acc_ref[...] += jnp.dot(x_blk, w_ref[...], preferred_element_type=jnp.float32)

    @pl.when(k == nk - 1)
    def _():
        o_ref[...] = (acc_ref[...] + b_ref[...].astype(jnp.float32)).astype(o_ref.dtype)


def build_linear(weight, bias, *, weight_dtype=jnp.bfloat16,
                 out_dtype=jnp.float32, tk_max=None, tn_max=None):
    """One-time setup for the Pallas linear layer.

    weight: (out_features, in_features)  -- PyTorch nn.Linear layout
    bias:   (out_features,)
    Returns (forward, w_padded, b_padded) with
      forward(x, w_padded, b_padded) -> (1, 1, out_features)
    All weight casting / transposition / padding happens HERE (init time); the
    per-call hot path contains only the pallas_call plus a tiny (1, K) pad.
    """
    N, K = weight.shape
    auto_tk, auto_tn, vmem_limit = _tile_budget(weight_dtype)
    tk_max = auto_tk if tk_max is None else tk_max
    tn_max = auto_tn if tn_max is None else tn_max

    # ---- N (output) axis: lane-dense multiple of 128; tn divides N_pad so no
    # padded weight columns are streamed beyond the mandatory <=127.
    N_pad = _round_up(N, 128)
    tn = _largest_aligned_divisor(N_pad, tn_max)

    # ---- K (reduction) axis: single full-extent block when it fits, else pad
    # only to the next multiple of 128 (<=127 wasted rows) and pick a dividing
    # 128-multiple tile.
    if K <= tk_max:
        K_pad, tk = K, K
    else:
        K_pad = _round_up(K, 128)
        tk = _largest_aligned_divisor(K_pad, tk_max)

    grid = (N_pad // tn, K_pad // tk)
    nk = grid[1]
    n_steps = grid[0] * grid[1]

    # ---- init-time weight/bias prep (NOT in the per-call hot path).
    w_t = jnp.asarray(weight, dtype=weight_dtype).T  # (K, N) = W^T
    if (K_pad != K) or (N_pad != N):
        w_t = jnp.pad(w_t, ((0, K_pad - K), (0, N_pad - N)))
    b2d = jnp.asarray(bias, dtype=jnp.float32).reshape(1, N)
    if N_pad != N:
        b2d = jnp.pad(b2d, ((0, 0), (0, N_pad - N)))
    w_pad = jax.block_until_ready(w_t)
    b_pad = jax.block_until_ready(b2d)

    # Weight streaming: deepen the pipeline when there are enough steps.
    if n_steps >= 3:
        try:
            w_spec = pl.BlockSpec((tk, tn), lambda j, k: (k, j),
                                  pipeline_mode=pl.Buffered(3))
        except TypeError:  # older BlockSpec without pipeline_mode
            w_spec = pl.BlockSpec((tk, tn), lambda j, k: (k, j))
    else:
        w_spec = pl.BlockSpec((tk, tn), lambda j, k: (k, j))

    cp_kwargs = dict(dimension_semantics=("parallel", "arbitrary"))
    if vmem_limit is not None:
        cp_kwargs["vmem_limit_bytes"] = vmem_limit

    bytes_accessed = (
        w_pad.size * w_pad.dtype.itemsize                    # weight (dominant)
        + K_pad * jnp.dtype(weight_dtype).itemsize           # x
        + N_pad * 4                                          # bias (f32)
        + N_pad * jnp.dtype(out_dtype).itemsize              # output
    )

    call = pl.pallas_call(
        functools.partial(_linear_kernel, tk=tk, nk=nk),
        out_shape=jax.ShapeDtypeStruct((1, N_pad), out_dtype),
        grid_spec=pltpu.PrefetchScalarGridSpec(
            num_scalar_prefetch=0,
            grid=grid,
            in_specs=[
                # x fully resident in VMEM: constant index map => single DMA.
                pl.BlockSpec((1, K_pad), lambda j, k: (0, 0)),
                w_spec,
                pl.BlockSpec((1, tn), lambda j, k: (0, j)),
            ],
            out_specs=pl.BlockSpec((1, tn), lambda j, k: (0, j)),
            scratch_shapes=[pltpu.VMEM((1, tn), jnp.float32)],
        ),
        compiler_params=pltpu.CompilerParams(**cp_kwargs),
        cost_estimate=pl.CostEstimate(
            flops=2 * K_pad * N_pad,
            transcendentals=0,
            bytes_accessed=bytes_accessed),
    )

    @jax.jit
    def forward(x, w_p, b_p):
        # Matches the PyTorch module: input reshaped to (1, 1, input_size).
        x2d = jnp.reshape(x, (1, K)).astype(weight_dtype)
        if K_pad != K:
            x2d = jnp.pad(x2d, ((0, 0), (0, K_pad - K)))  # tiny (1, K) pad only
        out2d = call(x2d, w_p, b_p)
        return out2d[:, :N].reshape(1, 1, N)

    return forward, w_pad, b_pad


def _run_case(key, input_size, output_size, *, tk_max=None, tn_max=None,
              weight_dtype=jnp.bfloat16):
    kx, kw, kb = jax.random.split(key, 3)
    bound = 1.0 / (input_size ** 0.5)
    # PyTorch nn.Linear layout + init: weight (out, in), bias (out,), U(-b, b).
    w = jax.random.uniform(kw, (output_size, input_size), jnp.float32,
                           minval=-bound, maxval=bound)
    b = jax.random.uniform(kb, (output_size,), jnp.float32,
                           minval=-bound, maxval=bound)
    x = jax.random.normal(kx, (input_size,), jnp.float32)

    forward, w_p, b_p = build_linear(w, b, weight_dtype=weight_dtype,
                                     tk_max=tk_max, tn_max=tn_max)
    out = jax.block_until_ready(forward(x, w_p, b_p))

    # Reference with the same bf16 weight/activation quantization, f32 math.
    x_c = x.astype(weight_dtype).astype(jnp.float32).reshape(1, 1, input_size)
    w_c = w.astype(weight_dtype).astype(jnp.float32)
    ref = jnp.matmul(x_c, w_c.T, precision=jax.lax.Precision.HIGHEST) + b

    assert out.shape == (1, 1, output_size), out.shape
    assert jnp.allclose(out, ref, atol=2e-3, rtol=2e-3), (
        f"mismatch vs reference for ({input_size}, {output_size})")


if __name__ == "__main__":
    key = jax.random.PRNGKey(0)
    k1, k2, k3, k4 = jax.random.split(key, 4)

    # Module-sized toy case: single block, N padded to 128 lanes, no K padding.
    _run_case(k1, input_size=32, output_size=16)

    # Device-derived tiles: K fits in one full-extent block, tn == N_pad.
    _run_case(k2, input_size=1024, output_size=384)

    # Forced small tiles: K tiling + accumulation, N tiling, 3-deep weight
    # pipeline (grid = (2, 3)).
    _run_case(k3, input_size=768, output_size=512, tk_max=256, tn_max=256)

    # Non-aligned sizes: K padded 300 -> 384 (tk=128, 3 steps), N padded 72 -> 128.
    _run_case(k4, input_size=300, output_size=72, tk_max=128, tn_max=128)

    print("KERNEL_OK")
</pallas_src>

<mosaic_0001>
module attributes {stable_mosaic.version = 11 : i64} {
  func.func @_linear_kernel(%arg0: i32, %arg1: i32, %arg2: memref<1x32xbf16, #tpu.memory_space<vmem>>, %arg3: memref<32x128xbf16, #tpu.memory_space<vmem>>, %arg4: memref<1x128xf32, #tpu.memory_space<vmem>>, %arg5: memref<1x128xf32, #tpu.memory_space<vmem>>, %arg6: memref<1x128xf32, #tpu.memory_space<vmem>>) attributes {dimension_semantics = [#tpu.dimension_semantics<parallel>, #tpu.dimension_semantics<arbitrary>], iteration_bounds = array<i64: 1, 1>, scalar_prefetch = 0 : i64, scratch_operands = 1 : i64, tpu.core_type = #tpu.core_type<tc>, window_params = [{pipeline_mode = #tpu.pipeline_mode<synchronous>, transform_indices = @transform_0, window_bounds = array<i64: 1, 32>}, {transform_indices = @transform_1, window_bounds = array<i64: 32, 128>}, {transform_indices = @transform_2, window_bounds = array<i64: 1, 128>}, {transform_indices = @transform_3, window_bounds = array<i64: 1, 128>}]} {
    %c0_i32 = arith.constant 0 : i32
    %0 = arith.cmpi eq, %arg1, %c0_i32 : i32
    %1 = arith.extui %0 : i1 to i32
    %c0_i32_0 = arith.constant 0 : i32
    %2 = arith.cmpi ne, %1, %c0_i32_0 : i32
    scf.if %2 {
      %cst_10 = arith.constant 0.000000e+00 : f32
      %12 = vector.broadcast %cst_10 : f32 to vector<1x128xf32>
      %c0_11 = arith.constant 0 : index
      %c0_12 = arith.constant 0 : index
      %13 = vector.load %arg6[%c0_11, %c0_12] : memref<1x128xf32, #tpu.memory_space<vmem>>, vector<1x128xf32>
      tpu.vector_store %arg6[%c0_11, %c0_12], %12 {strides = array<i32>} : memref<1x128xf32, #tpu.memory_space<vmem>>, vector<1x128xf32>,
    } else {
    }
    %c0 = arith.constant 0 : index
    %c0_1 = arith.constant 0 : index
    %3 = vector.load %arg2[%c0, %c0_1] : memref<1x32xbf16, #tpu.memory_space<vmem>>, vector<1x32xbf16>
    %c0_2 = arith.constant 0 : index
    %c0_3 = arith.constant 0 : index
    %4 = vector.load %arg6[%c0_2, %c0_3] : memref<1x128xf32, #tpu.memory_space<vmem>>, vector<1x128xf32>
    %c0_4 = arith.constant 0 : index
    %c0_5 = arith.constant 0 : index
    %5 = vector.load %arg3[%c0_4, %c0_5] : memref<32x128xbf16, #tpu.memory_space<vmem>>, vector<32x128xbf16>
    %cst = arith.constant dense<0.000000e+00> : vector<1x128xf32>
    %6 = tpu.matmul %3, %5, %cst {dimension_numbers = #tpu.dot_dimension_numbers<[1], [0], [0], [1], [0, 0, 1, 1], [], []>} : vector<1x32xbf16>, vector<32x128xbf16>, vector<1x128xf32> -> vector<1x128xf32>
    %7 = arith.addf %4, %6 : vector<1x128xf32>
    %c0_6 = arith.constant 0 : index
    %c0_7 = arith.constant 0 : index
    %8 = vector.load %arg6[%c0_6, %c0_7] : memref<1x128xf32, #tpu.memory_space<vmem>>, vector<1x128xf32>
    tpu.vector_store %arg6[%c0_6, %c0_7], %7 {strides = array<i32>} : memref<1x128xf32, #tpu.memory_space<vmem>>, vector<1x128xf32>,
    %c0_i32_8 = arith.constant 0 : i32
    %9 = arith.cmpi eq, %arg1, %c0_i32_8 : i32
    %10 = arith.extui %9 : i1 to i32
    %c0_i32_9 = arith.constant 0 : i32
    %11 = arith.cmpi ne, %10, %c0_i32_9 : i32
    scf.if %11 {
      %c0_10 = arith.constant 0 : index
      %c0_11 = arith.constant 0 : index
      %12 = vector.load %arg6[%c0_10, %c0_11] : memref<1x128xf32, #tpu.memory_space<vmem>>, vector<1x128xf32>
      %c0_12 = arith.constant 0 : index
      %c0_13 = arith.constant 0 : index
      %13 = vector.load %arg4[%c0_12, %c0_13] : memref<1x128xf32, #tpu.memory_space<vmem>>, vector<1x128xf32>
      %14 = arith.addf %12, %13 : vector<1x128xf32>
      %c0_14 = arith.constant 0 : index
      %c0_15 = arith.constant 0 : index
      %15 = vector.load %arg5[%c0_14, %c0_15] : memref<1x128xf32, #tpu.memory_space<vmem>>, vector<1x128xf32>
      tpu.vector_store %arg5[%c0_14, %c0_15], %14 {strides = array<i32>} : memref<1x128xf32, #tpu.memory_space<vmem>>, vector<1x128xf32>,
    } else {
    }
    return
  }
  func.func @transform_0(%arg0: i32, %arg1: i32) -> (i32, i32) {
    %c0_i32 = arith.constant 0 : i32
    %c0_i32_0 = arith.constant 0 : i32
    %c0_i32_1 = arith.constant 0 : i32
    return %c0_i32, %c0_i32_0 : i32, i32
  }
  func.func @transform_1(%arg0: i32, %arg1: i32) -> (i32, i32) {
    %c0_i32 = arith.constant 0 : i32
    return %arg1, %arg0 : i32, i32
  }
  func.func @transform_2(%arg0: i32, %arg1: i32) -> (i32, i32) {
    %c0_i32 = arith.constant 0 : i32
    %c0_i32_0 = arith.constant 0 : i32
    return %c0_i32, %arg0 : i32, i32
  }
  func.func @transform_3(%arg0: i32, %arg1: i32) -> (i32, i32) {
    %c0_i32 = arith.constant 0 : i32
    %c0_i32_0 = arith.constant 0 : i32
    return %c0_i32, %arg0 : i32, i32
  }
}

</mosaic_0001>

<llo_original>
// kernel: forward.1
$region0: #{forward.1}
  #allocation0 [shape = 'u32[]', space=smem, size = 0x4, offset = 0x4, fixed_abs, tag = 'smem constant byte address 0x4 - core index']
  #allocation1 [shape = 'u32[144,128]{1,0:T(1,128)}', space=vmem, size = 0x12000, scoped, tag = 'internal scratch']
  #allocation2 [shape = 'f32[1,128]{1,0:T(1,128)}', space=vmem, size = 0x200, scoped, tag = 'scratch operand']
  %s0 = inlined_call_operand.vmem [shape: bf16[1,32], index: 0, kind: input, shape index: {}]
  %s1 = inlined_call_operand.hbm [shape: bf16[32,128], index: 1, kind: input, shape index: {}]
  %s2 = inlined_call_operand.vmem [shape: f32[1,128], index: 2, kind: input, shape index: {}]
  %s3 = inlined_call_operand.vmem [shape: f32[1,128], index: 3, kind: output, shape index: {}]
  %s4 = sld [smem:[#allocation0]]
  $region34: #{forward.1} parent=0
    _
  %s6 = ssub.s32 1, %s4
  %s7 = scalar_select 0, %s6, %s4
  $region1: #{forward.1} parent=0
    #allocation3 [shape = 'u8[8192]{0}', space=vmem, size = 0x2000, scoped, tag = 'input window, operand 1, single buffered']
    #allocation4 [shape = 's32[1]{0}', space=sflag, size = 0x4, scoped, tag = 'scoped memory for forward.1']
    %8 = vsyncpa [#allocation4], 0
    // Predicated region
    $region2: #{forward.1} parent=1 // pred_check
      _
    $region3: #{forward.1} parent=1 // pred_check_branch
      %10 = sbr.rel (0) target = $region5
    $region4: #{forward.1} parent=1 // pred_region
      _
    $region5: #{forward.1} parent=1 // pred_fallthru
      _
    // Predicated region
    $region6: #{forward.1} parent=1 // pred_check
      _
    $region7: #{forward.1} parent=1 // pred_check_branch
      %12 = sbr.rel (0) target = $region9
    $region8: #{forward.1} parent=1 // pred_region
      %s14 = ssub.s32 256, 256
      %15 = vsyncadd [#allocation4], %s14
      %s16 = sshll.u32 [#allocation3], 4
      %s17 = int_to_ptr.vmem [resolvable:$true] %s16
      %22 = dma.hbm_to_vmem [thread:$0]  %s1, 256, %s17, [#allocation4], 64, 64, 4
    $region9: #{forward.1} parent=1 // pred_fallthru
      _
    // Predicated region
    $region10: #{forward.1} parent=1 // pred_check
      _
    $region11: #{forward.1} parent=1 // pred_check_branch
      %24 = sbr.rel (0) target = $region13
    $region12: #{forward.1} parent=1 // pred_region
      _
    $region13: #{forward.1} parent=1 // pred_fallthru
      _
    // Predicated region
    $region14: #{forward.1} parent=1 // pred_check
      _
    $region15: #{forward.1} parent=1 // pred_check_branch
      %26 = sbr.rel (0) target = $region17
    $region16: #{forward.1} parent=1 // pred_region
      %27 = dma.done [#allocation4], 256
    $region17: #{forward.1} parent=1 // pred_fallthru
      _
    %p29 = scmp.eq.s32.totalorder 0, 0
    // Predicated region
    $region18: #{forward.1} parent=1 // pred_check
      %p30 = pneg %p29
    $region19: #{forward.1} parent=1 // pred_check_branch
      %32 = sbr.rel (%p30) target = $region21
    $region20: #{forward.1} parent=1 // pred_region
      %33 = vst [vmem:[#allocation2] sm:$0x1] 0.0
    $region21: #{forward.1} parent=1 // pred_fallthru
      _
    %v34 = vld [vmem:[%s0] sm:$0x1]
    %v35 = vld [vmem:[#allocation2] sm:$0x1]
    %v36 = vld [vmem:[#allocation3] sm:$0xf]
    %v37 = vld [vmem:[#allocation3 + $0x4] sm:$0xf]
    %v38 = vld [vmem:[#allocation3 + $0x8] sm:$0xf]
    %v39 = vld [vmem:[#allocation3 + $0xc] sm:$0xf]
    %v44 = vunpack.c.l.b16 %v36
    %v45 = vunpack.c.l.b16 %v37
    %v46 = vunpack.c.l.b16 %v38
    %v47 = vunpack.c.l.b16 %v39
    %v48 = vpack.c.b16 %v45, %v44
    %v49 = vpack.c.b16 %v47, %v46
    %vm52 = vcmask 261120
    %v54 = vsel %vm52, %v34, 0
    %56 = vmatprep.subr.bf16.mxu0 0
    %57 = vmatpush1.bf16.msra.mxu0 0
    %58 = vmatprep.subr.bf16.mxu0 0
    %59 = vmatpush1.bf16.msra.mxu0 0
    %60 = vmatprep.subr.bf16.mxu0 0
    %61 = vmatpush1.bf16.msra.mxu0 0
    %62 = vmatprep.subr.bf16.mxu0 0
    %63 = vmatpush1.bf16.msra.mxu0 0
    %64 = vmatprep.subr.bf16.mxu0 0
    %65 = vmatpush1.bf16.msra.mxu0 0
    %66 = vmatprep.subr.bf16.mxu0 0
    %67 = vmatpush1.bf16.msra.mxu0 0
    %68 = vmatprep.subr.bf16.mxu0 0
    %69 = vmatpush1.bf16.msra.mxu0 %v49
    %70 = vmatprep.subr.bf16.mxu0 0
    %71 = vmatpush1.bf16.msra.mxu0 %v48
    %72 = vmatprep.subr.bf16.mxu0 0
    %73 = vmatpush2.bf16.msra.mxu0 0
    %74 = vmatprep.subr.bf16.mxu0 0
    %75 = vmatpush2.bf16.msra.mxu0 0
    %76 = vmatprep.subr.bf16.mxu0 0
    %77 = vmatpush2.bf16.msra.mxu0 0
    %78 = vmatprep.subr.bf16.mxu0 0
    %79 = vmatpush2.bf16.msra.mxu0 0
    %80 = vmatprep.subr.bf16.mxu0 0
    %81 = vmatpush2.bf16.msra.mxu0 0
    %82 = vmatprep.subr.bf16.mxu0 0
    %83 = vmatpush2.bf16.msra.mxu0 0
    %84 = vmatprep.subr.bf16.mxu0 0
    %85 = vmatpush2.bf16.msra.mxu0 0
    %86 = vmatprep.subr.bf16.mxu0 0
    %87 = vmatpush2.bf16.msra.mxu0 0
    %88 = vmatprep.mubr.bf16.mxu0 0
    %89 = vmatmul.mubr.bf16.gmra.mxu0 %v54
    %v90 = vpop.f32.mrf.mxu0
    %v91 = vadd.f32 0.0, %v90
    %v92 = vpop.f32.mrf.mxu0
    %v93 = vpop.f32.mrf.mxu0
    %v94 = vpop.f32.mrf.mxu0
    %95 = vdwg.mxu0
    %v96 = vadd.f32 %v35, %v91
    %97 = vst [vmem:[#allocation2] sm:$0x1] %v96
    // Predicated region
    $region22: #{forward.1} parent=1 // pred_check
      %p98 = pneg %p29
    $region23: #{forward.1} parent=1 // pred_check_branch
      %100 = sbr.rel (%p98) target = $region25
    $region24: #{forward.1} parent=1 // pred_region
      %v101 = vld [vmem:[#allocation2] sm:$0x1]
      %v102 = vld [vmem:[%s2] sm:$0x1]
      %v103 = vadd.f32 %v101, %v102
      %104 = vst [vmem:[%s3] sm:$0x1] %v103
    $region25: #{forward.1} parent=1 // pred_fallthru
      _
    // Predicated region
    $region26: #{forward.1} parent=1 // pred_check
      _
    $region27: #{forward.1} parent=1 // pred_check_branch
      %106 = sbr.rel (0) target = $region29
    $region28: #{forward.1} parent=1 // pred_region
      _
    $region29: #{forward.1} parent=1 // pred_fallthru
      _
    // Predicated region
    $region30: #{forward.1} parent=1 // pred_check
      _
    $region31: #{forward.1} parent=1 // pred_check_branch
      %108 = sbr.rel (0) target = $region33
    $region32: #{forward.1} parent=1 // pred_region
      _
    $region33: #{forward.1} parent=1 // pred_fallthru
      _
    %109 = vsyncpa [#allocation4], 1

</llo_original>
